<compile_context>
chip_gen: v6e
topology: v6e:2x2x1
jax: 0.10.0
libtpu: 0.0.40
codegen_flags: <defaults>
</compile_context>

<pallas_src>
import functools

import jax
import jax.numpy as jnp
from jax.experimental import pallas as pl
from jax.experimental.pallas import tpu as pltpu


def _policy_kernel(negative_slope, act_dtype):
    def kernel(x_ref, w1_ref, b1_ref, w2_ref, b2_ref, w3_ref, b3_ref, out_ref):
        # MXU operands in bf16, f32 accumulation; elementwise path in
        # act_dtype (bf16 on v6e/v7x, f32 on v5e and older).
        x = x_ref[...].astype(jnp.bfloat16)

        # Layer 1: Linear + LeakyReLU(0.2)
        h1 = jnp.dot(x, w1_ref[...], preferred_element_type=jnp.float32)
        h1 = h1.astype(act_dtype) + b1_ref[...]
        h1 = jnp.where(h1 > 0, h1, negative_slope * h1)

        # Layer 2: Linear + LeakyReLU(0.2)
        h2 = jnp.dot(h1.astype(jnp.bfloat16), w2_ref[...],
                     preferred_element_type=jnp.float32)
        h2 = h2.astype(act_dtype) + b2_ref[...]
        h2 = jnp.where(h2 > 0, h2, negative_slope * h2)

        # Output head (pre-sliced to the `means` columns in prepare_params).
        # Bias add + tanh kept in f32 (tiny width, output dtype is f32).
        y = jnp.dot(h2.astype(jnp.bfloat16), w3_ref[...],
                    preferred_element_type=jnp.float32) + b3_ref[...]
        out_ref[...] = jnp.tanh(y)

    return kernel


def default_bf16_activations():
    """bf16 VALUs exist on v6e/v7x; keep the f32 elementwise path on older gens."""
    try:
        kind = jax.devices()[0].device_kind.lower()
    except Exception:
        return False
    return not any(old in kind for old in ("v2", "v3", "v4", "v5"))


def prepare_params(params, action_dim, bf16_activations):
    """One-time weight preprocessing (hoisted out of the per-call forward).

    - Slices the output head to the `means` columns (== torch.chunk(...)[0]),
      so the log_std half is never loaded or computed.
    - Casts MXU weight operands to bf16.
    - Casts hidden-layer biases to the activation dtype; head bias stays f32.
    Call once at init / whenever the policy parameters are updated.
    """
    w1, b1, w2, b2, w3, b3 = params
    act_dtype = jnp.bfloat16 if bf16_activations else jnp.float32
    return (
        w1.astype(jnp.bfloat16), b1.astype(act_dtype),
        w2.astype(jnp.bfloat16), b2.astype(act_dtype),
        w3[:, :action_dim].astype(jnp.bfloat16),
        b3[:, :action_dim].astype(jnp.float32),
    )


@functools.partial(jax.jit, static_argnames=("negative_slope", "block_b",
                                             "bf16_activations"))
def latent_gaussian_policy_forward(feature_action, prepared_params,
                                   negative_slope=0.2, block_b=1024,
                                   bf16_activations=True):
    """Policy forward pass (tanh of means head) in one Pallas kernel."""
    w1, b1, w2, b2, w3, b3 = prepared_params
    B, in_dim = feature_action.shape
    hid1 = w1.shape[1]
    hid2 = w2.shape[1]
    action_dim = w3.shape[1]
    act_dtype = jnp.bfloat16 if bf16_activations else jnp.float32

    # Batch tile: multiple of 8 sublanes.  Target >= 2 grid steps when B
    # allows (v7x megacore), capped at block_b to keep per-step overhead
    # amortized.  No padding: the ragged final block is masked by Pallas.
    half = (B + 1) // 2
    tb = min(block_b, ((half + 7) // 8) * 8)
    tb = max(tb, 8)
    grid = (pl.cdiv(B, tb),)

    # Weights/biases: constant index_map -> loaded once, VMEM-resident across
    # the whole grid.
    const_spec = lambda a: pl.BlockSpec(a.shape, lambda i: (0,) * a.ndim,
                                        memory_space=pltpu.VMEM)

    act_bytes = 2 if bf16_activations else 4
    weight_bytes = ((w1.size + w2.size + w3.size) * 2
                    + (b1.size + b2.size) * act_bytes + b3.size * 4)
    flops = 2 * B * (in_dim * hid1 + hid1 * hid2 + hid2 * action_dim)
    bytes_accessed = (weight_bytes
                      + B * in_dim * feature_action.dtype.itemsize
                      + B * action_dim * 4)
    cost = pl.CostEstimate(flops=flops,
                           transcendentals=B * action_dim,
                           bytes_accessed=bytes_accessed)

    # Scoped-VMEM limit with headroom for the (tb, 256) intermediates.
    vmem_est = (2 * tb * in_dim * 4            # x, double-buffered
                + 2 * tb * action_dim * 4      # out, double-buffered
                + 2 * weight_bytes             # weights/biases (dbl-buffered)
                + 6 * tb * max(hid1, hid2) * 4)  # h1/h2 temps + slack
    vmem_limit = int(min(max(vmem_est, 16 * 1024 * 1024), 48 * 1024 * 1024))

    out = pl.pallas_call(
        _policy_kernel(negative_slope, act_dtype),
        out_shape=jax.ShapeDtypeStruct((B, action_dim), jnp.float32),
        grid=grid,
        in_specs=[
            pl.BlockSpec((tb, in_dim), lambda i: (i, 0),
                         memory_space=pltpu.VMEM),
            const_spec(w1), const_spec(b1),
            const_spec(w2), const_spec(b2),
            const_spec(w3), const_spec(b3),
        ],
        out_specs=pl.BlockSpec((tb, action_dim), lambda i: (i, 0),
                               memory_space=pltpu.VMEM),
        compiler_params=pltpu.CompilerParams(
            dimension_semantics=("parallel",),
            vmem_limit_bytes=vmem_limit),
        cost_estimate=cost,
    )(feature_action, w1, b1, w2, b2, w3, b3)

    return out


def init_params(key, in_dim, hidden_units, out_dim):
    """Deterministic synthetic init (stand-in for initialize_weight)."""
    dims = [in_dim, *hidden_units, out_dim]
    params = []
    for i in range(len(dims) - 1):
        key, wk = jax.random.split(key)
        fan_in, fan_out = dims[i], dims[i + 1]
        # small scaled-normal init; weights stored as (in, out)
        w = jax.random.normal(wk, (fan_in, fan_out), jnp.float32) / jnp.sqrt(fan_in)
        b = jnp.zeros((1, fan_out), jnp.float32)  # kept 2D for TPU layout
        params += [w, b]
    return params


def reference_forward(x, prepared_params, negative_slope=0.2):
    """Pure-JAX reference replicating the kernel's mixed precision."""
    w1, b1, w2, b2, w3m, b3m = prepared_params
    act_dtype = b1.dtype
    h1 = jnp.dot(x.astype(jnp.bfloat16), w1,
                 preferred_element_type=jnp.float32).astype(act_dtype) + b1
    h1 = jnp.where(h1 > 0, h1, negative_slope * h1)
    h2 = jnp.dot(h1.astype(jnp.bfloat16), w2,
                 preferred_element_type=jnp.float32).astype(act_dtype) + b2
    h2 = jnp.where(h2 > 0, h2, negative_slope * h2)
    y = jnp.dot(h2.astype(jnp.bfloat16), w3m,
                preferred_element_type=jnp.float32) + b3m
    return jnp.tanh(y)


if __name__ == "__main__":
    # Small shapes consistent with the module:
    #   z1_dim=32, z2_dim=32 -> input_dim=64; hidden_units=(256, 256);
    #   action_shape=(2,) -> net output_dim = 2*2 = 4, means dim = 2.
    B = 8
    z1_dim, z2_dim = 32, 32
    hidden_units = (256, 256)
    action_dim = 2

    key = jax.random.PRNGKey(0)
    key, xk = jax.random.split(key)
    feature_action = jax.random.normal(xk, (B, z1_dim + z2_dim), jnp.float32)

    params = init_params(key, z1_dim + z2_dim, hidden_units, 2 * action_dim)

    # One-time preprocessing (would be redone only on parameter updates).
    use_bf16_act = default_bf16_activations()
    prepared = prepare_params(tuple(params), action_dim, use_bf16_act)
    prepared = jax.block_until_ready(prepared)

    out = latent_gaussian_policy_forward(feature_action, prepared,
                                         bf16_activations=use_bf16_act)
    out = jax.block_until_ready(out)

    # Check against a pure-JAX reference with matching mixed precision.
    ref = reference_forward(feature_action, prepared)
    assert out.shape == (B, action_dim)
    assert jnp.allclose(out, ref, atol=2e-3, rtol=2e-3), (
        float(jnp.max(jnp.abs(out - ref))))

    # Looser sanity check against a pure-f32 reference (bf16 rounding).
    w1, b1, w2, b2, w3, b3 = params
    h1 = feature_action @ w1 + b1
    h1 = jnp.where(h1 > 0, h1, 0.2 * h1)
    h2 = h1 @ w2 + b2
    h2 = jnp.where(h2 > 0, h2, 0.2 * h2)
    ref_f32 = jnp.tanh((h2 @ w3 + b3)[:, :action_dim])
    assert jnp.allclose(out, ref_f32, atol=4e-2, rtol=4e-2), (
        float(jnp.max(jnp.abs(out - ref_f32))))

    # TODO(synk): sample()/reparameterize (stochastic path) not implemented;
    # only the deterministic forward (tanh of means) is kernelized.
    print("KERNEL_OK")
</pallas_src>

<mosaic_0001>
module attributes {stable_mosaic.version = 11 : i64} {
  func.func @kernel(%arg0: i32, %arg1: memref<8x64xf32, #tpu.memory_space<vmem>>, %arg2: memref<64x256xbf16, #tpu.memory_space<vmem>>, %arg3: memref<1x256xbf16, #tpu.memory_space<vmem>>, %arg4: memref<256x256xbf16, #tpu.memory_space<vmem>>, %arg5: memref<1x256xbf16, #tpu.memory_space<vmem>>, %arg6: memref<256x2xbf16, #tpu.memory_space<vmem>>, %arg7: memref<1x2xf32, #tpu.memory_space<vmem>>, %arg8: memref<8x2xf32, #tpu.memory_space<vmem>>) attributes {dimension_semantics = [#tpu.dimension_semantics<parallel>], iteration_bounds = array<i64: 1>, scalar_prefetch = 0 : i64, scratch_operands = 0 : i64, tpu.core_type = #tpu.core_type<tc>, window_params = [{transform_indices = @transform_0, window_bounds = array<i64: 8, 64>}, {pipeline_mode = #tpu.pipeline_mode<synchronous>, transform_indices = @transform_1, window_bounds = array<i64: 64, 256>}, {pipeline_mode = #tpu.pipeline_mode<synchronous>, transform_indices = @transform_2, window_bounds = array<i64: 1, 256>}, {pipeline_mode = #tpu.pipeline_mode<synchronous>, transform_indices = @transform_3, window_bounds = array<i64: 256, 256>}, {pipeline_mode = #tpu.pipeline_mode<synchronous>, transform_indices = @transform_4, window_bounds = array<i64: 1, 256>}, {pipeline_mode = #tpu.pipeline_mode<synchronous>, transform_indices = @transform_5, window_bounds = array<i64: 256, 2>}, {pipeline_mode = #tpu.pipeline_mode<synchronous>, transform_indices = @transform_6, window_bounds = array<i64: 1, 2>}, {transform_indices = @transform_7, window_bounds = array<i64: 8, 2>}]} {
    %c0 = arith.constant 0 : index
    %c0_0 = arith.constant 0 : index
    %0 = vector.load %arg1[%c0, %c0_0] : memref<8x64xf32, #tpu.memory_space<vmem>>, vector<8x64xf32>
    %1 = arith.truncf %0 : vector<8x64xf32> to vector<8x64xbf16>
    %c0_1 = arith.constant 0 : index
    %c0_2 = arith.constant 0 : index
    %2 = vector.load %arg2[%c0_1, %c0_2] : memref<64x256xbf16, #tpu.memory_space<vmem>>, vector<64x256xbf16>
    %cst = arith.constant dense<0.000000e+00> : vector<8x256xf32>
    %3 = tpu.matmul %1, %2, %cst {dimension_numbers = #tpu.dot_dimension_numbers<[1], [0], [0], [1], [0, 0, 1, 1], [], []>} : vector<8x64xbf16>, vector<64x256xbf16>, vector<8x256xf32> -> vector<8x256xf32>
    %4 = arith.truncf %3 : vector<8x256xf32> to vector<8x256xbf16>
    %c0_3 = arith.constant 0 : index
    %c0_4 = arith.constant 0 : index
    %5 = vector.load %arg3[%c0_3, %c0_4] : memref<1x256xbf16, #tpu.memory_space<vmem>>, vector<1x256xbf16>
    %6 = vector.broadcast %5 : vector<1x256xbf16> to vector<8x256xbf16>
    %7 = arith.addf %4, %6 : vector<8x256xbf16>
    %cst_5 = arith.constant 0.000000e+00 : bf16
    %8 = vector.broadcast %cst_5 : bf16 to vector<8x256xbf16>
    %9 = arith.cmpf ogt, %7, %8 : vector<8x256xbf16>
    %cst_6 = arith.constant 2.001950e-01 : bf16
    %10 = vector.broadcast %cst_6 : bf16 to vector<8x256xbf16>
    %11 = arith.mulf %10, %7 : vector<8x256xbf16>
    %12 = arith.select %9, %7, %11 : vector<8x256xi1>, vector<8x256xbf16>
    %c0_7 = arith.constant 0 : index
    %c0_8 = arith.constant 0 : index
    %13 = vector.load %arg4[%c0_7, %c0_8] : memref<256x256xbf16, #tpu.memory_space<vmem>>, vector<256x256xbf16>
    %cst_9 = arith.constant dense<0.000000e+00> : vector<8x256xf32>
    %14 = tpu.matmul %12, %13, %cst_9 {dimension_numbers = #tpu.dot_dimension_numbers<[1], [0], [0], [1], [0, 0, 1, 1], [], []>} : vector<8x256xbf16>, vector<256x256xbf16>, vector<8x256xf32> -> vector<8x256xf32>
    %15 = arith.truncf %14 : vector<8x256xf32> to vector<8x256xbf16>
    %c0_10 = arith.constant 0 : index
    %c0_11 = arith.constant 0 : index
    %16 = vector.load %arg5[%c0_10, %c0_11] : memref<1x256xbf16, #tpu.memory_space<vmem>>, vector<1x256xbf16>
    %17 = vector.broadcast %16 : vector<1x256xbf16> to vector<8x256xbf16>
    %18 = arith.addf %15, %17 : vector<8x256xbf16>
    %cst_12 = arith.constant 0.000000e+00 : bf16
    %19 = vector.broadcast %cst_12 : bf16 to vector<8x256xbf16>
    %20 = arith.cmpf ogt, %18, %19 : vector<8x256xbf16>
    %cst_13 = arith.constant 2.001950e-01 : bf16
    %21 = vector.broadcast %cst_13 : bf16 to vector<8x256xbf16>
    %22 = arith.mulf %21, %18 : vector<8x256xbf16>
    %23 = arith.select %20, %18, %22 : vector<8x256xi1>, vector<8x256xbf16>
    %c0_14 = arith.constant 0 : index
    %c0_15 = arith.constant 0 : index
    %24 = vector.load %arg6[%c0_14, %c0_15] : memref<256x2xbf16, #tpu.memory_space<vmem>>, vector<256x2xbf16>
    %cst_16 = arith.constant dense<0.000000e+00> : vector<8x2xf32>
    %25 = tpu.matmul %23, %24, %cst_16 {dimension_numbers = #tpu.dot_dimension_numbers<[1], [0], [0], [1], [0, 0, 1, 1], [], []>} : vector<8x256xbf16>, vector<256x2xbf16>, vector<8x2xf32> -> vector<8x2xf32>
    %c0_17 = arith.constant 0 : index
    %c0_18 = arith.constant 0 : index
    %26 = vector.load %arg7[%c0_17, %c0_18] : memref<1x2xf32, #tpu.memory_space<vmem>>, vector<1x2xf32>
    %27 = vector.broadcast %26 : vector<1x2xf32> to vector<8x2xf32>
    %28 = arith.addf %25, %27 : vector<8x2xf32>
    %29 = math.tanh %28 : vector<8x2xf32>
    %c0_19 = arith.constant 0 : index
    %c0_20 = arith.constant 0 : index
    %30 = vector.load %arg8[%c0_19, %c0_20] : memref<8x2xf32, #tpu.memory_space<vmem>>, vector<8x2xf32>
    tpu.vector_store %arg8[%c0_19, %c0_20], %29 {strides = array<i32>} : memref<8x2xf32, #tpu.memory_space<vmem>>, vector<8x2xf32>,
    return
  }
  func.func @transform_0(%arg0: i32) -> (i32, i32) {
    %c0_i32 = arith.constant 0 : i32
    %c0_i32_0 = arith.constant 0 : i32
    return %arg0, %c0_i32 : i32, i32
  }
  func.func @transform_1(%arg0: i32) -> (i32, i32) {
    %c0_i32 = arith.constant 0 : i32
    %c0_i32_0 = arith.constant 0 : i32
    %c0_i32_1 = arith.constant 0 : i32
    return %c0_i32, %c0_i32_0 : i32, i32
  }
  func.func @transform_2(%arg0: i32) -> (i32, i32) {
    %c0_i32 = arith.constant 0 : i32
    %c0_i32_0 = arith.constant 0 : i32
    %c0_i32_1 = arith.constant 0 : i32
    return %c0_i32, %c0_i32_0 : i32, i32
  }
  func.func @transform_3(%arg0: i32) -> (i32, i32) {
    %c0_i32 = arith.constant 0 : i32
    %c0_i32_0 = arith.constant 0 : i32
    %c0_i32_1 = arith.constant 0 : i32
    return %c0_i32, %c0_i32_0 : i32, i32
  }
  func.func @transform_4(%arg0: i32) -> (i32, i32) {
    %c0_i32 = arith.constant 0 : i32
    %c0_i32_0 = arith.constant 0 : i32
    %c0_i32_1 = arith.constant 0 : i32
    return %c0_i32, %c0_i32_0 : i32, i32
  }
  func.func @transform_5(%arg0: i32) -> (i32, i32) {
    %c0_i32 = arith.constant 0 : i32
    %c0_i32_0 = arith.constant 0 : i32
    %c0_i32_1 = arith.constant 0 : i32
    return %c0_i32, %c0_i32_0 : i32, i32
  }
  func.func @transform_6(%arg0: i32) -> (i32, i32) {
    %c0_i32 = arith.constant 0 : i32
    %c0_i32_0 = arith.constant 0 : i32
    %c0_i32_1 = arith.constant 0 : i32
    return %c0_i32, %c0_i32_0 : i32, i32
  }
  func.func @transform_7(%arg0: i32) -> (i32, i32) {
    %c0_i32 = arith.constant 0 : i32
    %c0_i32_0 = arith.constant 0 : i32
    return %arg0, %c0_i32 : i32, i32
  }
}

</mosaic_0001>

<llo_original>
// kernel: latent_gaussian_policy_forward.1
$region0: #{latent_gaussian_policy_forward.1}
  #allocation0 [shape = 'u32[]', space=smem, size = 0x4, offset = 0x4, fixed_abs, tag = 'smem constant byte address 0x4 - core index']
  #allocation1 [shape = 'u32[144,128]{1,0:T(1,128)}', space=vmem, size = 0x12000, scoped, tag = 'internal scratch']
  %s0 = inlined_call_operand.vmem [shape: f32[8,64], index: 0, kind: input, shape index: {}]
  %s1 = inlined_call_operand.vmem [shape: bf16[64,256], index: 1, kind: input, shape index: {}]
  %s2 = inlined_call_operand.vmem [shape: bf16[1,256], index: 2, kind: input, shape index: {}]
  %s3 = inlined_call_operand.hbm [shape: bf16[256,256], index: 3, kind: input, shape index: {}]
  %s4 = inlined_call_operand.vmem [shape: bf16[1,256], index: 4, kind: input, shape index: {}]
  %s5 = inlined_call_operand.vmem [shape: bf16[256,2], index: 5, kind: input, shape index: {}]
  %s6 = inlined_call_operand.vmem [shape: f32[1,2], index: 6, kind: input, shape index: {}]
  %s7 = inlined_call_operand.vmem [shape: f32[8,2], index: 7, kind: output, shape index: {}]
  %s8 = sld [smem:[#allocation0]]
  $region42: #{latent_gaussian_policy_forward.1} parent=0
    _
  %s10 = ssub.s32 1, %s8
  %s11 = scalar_select 0, %s10, %s8
  $region1: #{latent_gaussian_policy_forward.1} parent=0
    #allocation2 [shape = 'u8[131072]{0}', space=vmem, size = 0x20000, scoped, tag = 'input window, operand 3, single buffered']
    #allocation3 [shape = 's32[1]{0}', space=sflag, size = 0x4, scoped, tag = 'scoped memory for latent_gaussian_policy_forward.1']
    %12 = vsyncpa [#allocation3], 0
    // Predicated region
    $region2: #{latent_gaussian_policy_forward.1} parent=1 // pred_check
      _
    $region3: #{latent_gaussian_policy_forward.1} parent=1 // pred_check_branch
      %14 = sbr.rel (0) target = $region5
    $region4: #{latent_gaussian_policy_forward.1} parent=1 // pred_region
      _
    $region5: #{latent_gaussian_policy_forward.1} parent=1 // pred_fallthru
      _
    // Predicated region
    $region6: #{latent_gaussian_policy_forward.1} parent=1 // pred_check
      _
    $region7: #{latent_gaussian_policy_forward.1} parent=1 // pred_check_branch
      %16 = sbr.rel (0) target = $region9
    $region8: #{latent_gaussian_policy_forward.1} parent=1 // pred_region
      _
    $region9: #{latent_gaussian_policy_forward.1} parent=1 // pred_fallthru
      _
    // Predicated region
    $region10: #{latent_gaussian_policy_forward.1} parent=1 // pred_check
      _
    $region11: #{latent_gaussian_policy_forward.1} parent=1 // pred_check_branch
      %18 = sbr.rel (0) target = $region13
    $region12: #{latent_gaussian_policy_forward.1} parent=1 // pred_region
      _
    $region13: #{latent_gaussian_policy_forward.1} parent=1 // pred_fallthru
      _
    // Predicated region
    $region14: #{latent_gaussian_policy_forward.1} parent=1 // pred_check
      _
    $region15: #{latent_gaussian_policy_forward.1} parent=1 // pred_check_branch
      %20 = sbr.rel (0) target = $region17
    $region16: #{latent_gaussian_policy_forward.1} parent=1 // pred_region
      %s22 = ssub.s32 4096, 4096
      %23 = vsyncadd [#allocation3], %s22
      %s24 = sshll.u32 [#allocation2], 4
      %s25 = int_to_ptr.vmem [resolvable:$true] %s24
      %30 = dma.hbm_to_vmem [thread:$0]  %s3, 4096, %s25, [#allocation3], 128, 128, 8
    $region17: #{latent_gaussian_policy_forward.1} parent=1 // pred_fallthru
      _
    // Predicated region
    $region18: #{latent_gaussian_policy_forward.1} parent=1 // pred_check
      _
    $region19: #{latent_gaussian_policy_forward.1} parent=1 // pred_check_branch
      %32 = sbr.rel (0) target = $region21
    $region20: #{latent_gaussian_policy_forward.1} parent=1 // pred_region
      _
    $region21: #{latent_gaussian_policy_forward.1} parent=1 // pred_fallthru
      _
    // Predicated region
    $region22: #{latent_gaussian_policy_forward.1} parent=1 // pred_check
      _
    $region23: #{latent_gaussian_policy_forward.1} parent=1 // pred_check_branch
      %34 = sbr.rel (0) target = $region25
    $region24: #{latent_gaussian_policy_forward.1} parent=1 // pred_region
      _
    $region25: #{latent_gaussian_policy_forward.1} parent=1 // pred_fallthru
      _
    // Predicated region
    $region26: #{latent_gaussian_policy_forward.1} parent=1 // pred_check
      _
    $region27: #{latent_gaussian_policy_forward.1} parent=1 // pred_check_branch
      %36 = sbr.rel (0) target = $region29
    $region28: #{latent_gaussian_policy_forward.1} parent=1 // pred_region
      _
    $region29: #{latent_gaussian_policy_forward.1} parent=1 // pred_fallthru
      _
    // Predicated region
    $region30: #{latent_gaussian_policy_forward.1} parent=1 // pred_check
      _
    $region31: #{latent_gaussian_policy_forward.1} parent=1 // pred_check_branch
      %38 = sbr.rel (0) target = $region33
    $region32: #{latent_gaussian_policy_forward.1} parent=1 // pred_region
      %39 = dma.done [#allocation3], 4096
    $region33: #{latent_gaussian_policy_forward.1} parent=1 // pred_fallthru
      _
    %v42 = vld [vmem:[%s0] sm:$0xff]
    %v43 = vpack.c.bf16 %v42, %v42
    %v44 = vld [vmem:[%s1] sm:$0xff]
    %v45 = vld [vmem:[%s1 + $0x8] sm:$0xff]
    %v46 = vld [vmem:[%s1 + $0x10] sm:$0xff]
    %v47 = vld [vmem:[%s1 + $0x18] sm:$0xff]
    %v48 = vld [vmem:[%s1 + $0x20] sm:$0xff]
    %v49 = vld [vmem:[%s1 + $0x28] sm:$0xff]
    %v50 = vld [vmem:[%s1 + $0x30] sm:$0xff]
    %v51 = vld [vmem:[%s1 + $0x38] sm:$0xff]
    %v60 = vunpack.c.l.b16 %v44
    %v61 = vunpack.c.h.b16 %v44
    %v62 = vunpack.c.l.b16 %v45
    %v63 = vunpack.c.h.b16 %v45
    %v64 = vunpack.c.l.b16 %v46
    %v65 = vunpack.c.h.b16 %v46
    %v66 = vunpack.c.l.b16 %v47
    %v67 = vunpack.c.h.b16 %v47
    %v68 = vunpack.c.l.b16 %v48
    %v69 = vunpack.c.h.b16 %v48
    %v70 = vunpack.c.l.b16 %v49
    %v71 = vunpack.c.h.b16 %v49
    %v72 = vunpack.c.l.b16 %v50
    %v73 = vunpack.c.h.b16 %v50
    %v74 = vunpack.c.l.b16 %v51
    %v75 = vunpack.c.h.b16 %v51
    %v76 = vpack.c.b16 %v62, %v60
    %v77 = vpack.c.b16 %v63, %v61
    %v78 = vpack.c.b16 %v66, %v64
    %v79 = vpack.c.b16 %v67, %v65
    %v80 = vpack.c.b16 %v70, %v68
    %v81 = vpack.c.b16 %v71, %v69
    %v82 = vpack.c.b16 %v74, %v72
    %v83 = vpack.c.b16 %v75, %v73
    %vm92 = vcmask 523264
    %v94 = vsel %vm92, %v43, 0
    %96 = vmatprep.subr.bf16.mxu0 0
    %97 = vmatpush1.bf16.msra.mxu0 0
    %98 = vmatprep.subr.bf16.mxu0 0
    %99 = vmatpush1.bf16.msra.mxu0 0
    %100 = vmatprep.subr.bf16.mxu0 0
    %101 = vmatpush1.bf16.msra.mxu0 0
    %102 = vmatprep.subr.bf16.mxu0 0
    %103 = vmatpush1.bf16.msra.mxu0 0
    %104 = vmatprep.subr.bf16.mxu0 %v83
    %105 = vmatpush1.bf16.msra.mxu0 %v82
    %106 = vmatprep.subr.bf16.mxu0 %v81
    %107 = vmatpush1.bf16.msra.mxu0 %v80
    %108 = vmatprep.subr.bf16.mxu0 %v79
    %109 = vmatpush1.bf16.msra.mxu0 %v78
    %110 = vmatprep.subr.bf16.mxu0 %v77
    %111 = vmatpush1.bf16.msra.mxu0 %v76
    %112 = vmatprep.subr.bf16.mxu0 0
    %113 = vmatpush2.bf16.msra.mxu0 0
    %114 = vmatprep.subr.bf16.mxu0 0
    %115 = vmatpush2.bf16.msra.mxu0 0
    %116 = vmatprep.subr.bf16.mxu0 0
    %117 = vmatpush2.bf16.msra.mxu0 0
    %118 = vmatprep.subr.bf16.mxu0 0
    %119 = vmatpush2.bf16.msra.mxu0 0
    %120 = vmatprep.subr.bf16.mxu0 0
    %121 = vmatpush2.bf16.msra.mxu0 0
    %122 = vmatprep.subr.bf16.mxu0 0
    %123 = vmatpush2.bf16.msra.mxu0 0
    %124 = vmatprep.subr.bf16.mxu0 0
    %125 = vmatpush2.bf16.msra.mxu0 0
    %126 = vmatprep.subr.bf16.mxu0 0
    %127 = vmatpush2.bf16.msra.mxu0 0
    %128 = vmatprep.mubr.bf16.mxu0 0
    %129 = vmatmul.mubr.bf16.gmra.mxu0 %v94
    %v130 = vpop.f32.mrf.mxu0
    %v131 = vadd.f32 0.0, %v130
    %v132 = vpop.f32.mrf.mxu0
    %v133 = vadd.f32 0.0, %v132
    %v134 = vpop.f32.mrf.mxu0
    %v135 = vpop.f32.mrf.mxu0
    %136 = vdwg.mxu0
    %v137 = vpack.c.bf16 %v131, %v131
    %v138 = vpack.c.bf16 %v133, %v133
    %v139 = vld [vmem:[%s2] sm:$0x3]
    %v142 = vunpack.c.l.s4 1966171168
    %v143 = vunpack.c.0.s8 %v142
    %v144 = vlaneseq
    %v145 = vshrl.u32 %v144, 7
    %v146 = vsub.s32 %v143, %v145
    %v147 = vrot.slane %v139, %v146
    %v148 = vcombine.high %v147, %v147
    %v150 = vunpack.c.l.s4 1966171168
    %v151 = vunpack.c.0.s8 %v150
    %v152 = vlaneseq
    %v153 = vshrl.u32 %v152, 7
    %v154 = vsub.s32 %v151, %v153
    %v155 = vrot.slane %v147, %v154
    %v157 = vunpack.c.l.s4 1966171168
    %v158 = vunpack.c.0.s8 %v157
    %v159 = vlaneseq
    %v160 = vshrl.u32 %v159, 7
    %v161 = vsub.s32 %v158, %v160
    %v162 = vrot.slane %v148, %v161
    %v164 = vpack.i.b16 %v155, %v155
    %v166 = vlaneseq
    %v167 = vshrl.u32 %v166, 7
    %v168 = vsub.s32 0, %v167
    %v169 = vrot.slane %v164, %v168
    %v171 = vpack.i.b16 %v162, %v162
    %v173 = vlaneseq
    %v174 = vshrl.u32 %v173, 7
    %v175 = vsub.s32 0, %v174
    %v176 = vrot.slane %v171, %v175
    %v177 = vadd.bf16 %v137, %v169
    %v178 = vadd.bf16 %v138, %v176
    %vm179 = vcmp.gt.bf16.partialorder %v177, 0
    %vm180 = vcmp.gt.bf16.partialorder %v178, 0
    %v181 = vmul.bf16 %v177, 1045249613
    %v182 = vmul.bf16 %v178, 1045249613
    %v183 = vsel %vm179, %v177, %v181
    %v184 = vsel %vm180, %v178, %v182
    %v185 = vld [vmem:[#allocation2] sm:$0xff]
    %v186 = vld [vmem:[#allocation2 + $0x8] sm:$0xff]
    %v187 = vld [vmem:[#allocation2 + $0x10] sm:$0xff]
    %v188 = vld [vmem:[#allocation2 + $0x18] sm:$0xff]
    %v189 = vld [vmem:[#allocation2 + $0x20] sm:$0xff]
    %v190 = vld [vmem:[#allocation2 + $0x28] sm:$0xff]
    %v191 = vld [vmem:[#allocation2 + $0x30] sm:$0xff]
    %v192 = vld [vmem:[#allocation2 + $0x38] sm:$0xff]
    %v193 = vld [vmem:[#allocation2 + $0x40] sm:$0xff]
    %v194 = vld [vmem:[#allocation2 + $0x48] sm:$0xff]
    %v195 = vld [vmem:[#allocation2 + $0x50] sm:$0xff]
    %v196 = vld [vmem:[#allocation2 + $0x58] sm:$0xff]
    %v197 = vld [vmem:[#allocation2 + $0x60] sm:$0xff]
    %v198 = vld [vmem:[#allocation2 + $0x68] sm:$0xff]
    %v199 = vld [vmem:[#allocation2 + $0x70] sm:$0xff]
    %v200 = vld [vmem:[#allocation2 + $0x78] sm:$0xff]
    %v201 = vld [vmem:[#allocation2 + $0x80] sm:$0xff]
    %v202 = vld [vmem:[#allocation2 + $0x88] sm:$0xff]
    %v203 = vld [vmem:[#allocation2 + $0x90] sm:$0xff]
    %v204 = vld [vmem:[#allocation2 + $0x98] sm:$0xff]
    %v205 = vld [vmem:[#allocation2 + $0xa0] sm:$0xff]
    %v206 = vld [vmem:[#allocation2 + $0xa8] sm:$0xff]
    %v207 = vld [vmem:[#allocation2 + $0xb0] sm:$0xff]
    %v208 = vld [vmem:[#allocation2 + $0xb8] sm:$0xff]
    %v209 = vld [vmem:[#allocation2 + $0xc0] sm:$0xff]
    %v210 = vld [vmem:[#allocation2 + $0xc8] sm:$0xff]
    %v211 = vld [vmem:[#allocation2 + $0xd0] sm:$0xff]
    %v212 = vld [vmem:[#allocation2 + $0xd8] sm:$0xff]
    %v213 = vld [vmem:[#allocation2 + $0xe0] sm:$0xff]
    %v214 = vld [vmem:[#allocation2 + $0xe8] sm:$0xff]
    %v215 = vld [vmem:[#allocation2 + $0xf0] sm:$0xff]
    %v216 = vld [vmem:[#allocation2 + $0xf8] sm:$0xff]
    %v249 = vunpack.c.l.b16 %v185
    %v250 = vunpack.c.h.b16 %v185
    %v251 = vunpack.c.l.b16 %v186
    %v252 = vunpack.c.h.b16 %v186
    %v253 = vunpack.c.l.b16 %v187
    %v254 = vunpack.c.h.b16 %v187
    %v255 = vunpack.c.l.b16 %v188
    %v256 = vunpack.c.h.b16 %v188
    %v257 = vunpack.c.l.b16 %v189
    %v258 = vunpack.c.h.b16 %v189
    %v259 = vunpack.c.l.b16 %v190
    %v260 = vunpack.c.h.b16 %v190
    %v261 = vunpack.c.l.b16 %v191
    %v262 = vunpack.c.h.b16 %v191
    %v263 = vunpack.c.l.b16 %v192
    %v264 = vunpack.c.h.b16 %v192
    %v265 = vunpack.c.l.b16 %v193
    %v266 = vunpack.c.h.b16 %v193
    %v267 = vunpack.c.l.b16 %v194
    %v268 = vunpack.c.h.b16 %v194
    %v269 = vunpack.c.l.b16 %v195
    %v270 = vunpack.c.h.b16 %v195
    %v271 = vunpack.c.l.b16 %v196
    %v272 = vunpack.c.h.b16 %v196
    %v273 = vunpack.c.l.b16 %v197
    %v274 = vunpack.c.h.b16 %v197
    %v275 = vunpack.c.l.b16 %v198
    %v276 = vunpack.c.h.b16 %v198
    %v277 = vunpack.c.l.b16 %v199
    %v278 = vunpack.c.h.b16 %v199
    %v279 = vunpack.c.l.b16 %v200
    %v280 = vunpack.c.h.b16 %v200
    %v281 = vunpack.c.l.b16 %v201
    %v282 = vunpack.c.h.b16 %v201
    %v283 = vunpack.c.l.b16 %v202
    %v284 = vunpack.c.h.b16 %v202
    %v285 = vunpack.c.l.b16 %v203
    %v286 = vunpack.c.h.b16 %v203
    %v287 = vunpack.c.l.b16 %v204
    %v288 = vunpack.c.h.b16 %v204
    %v289 = vunpack.c.l.b16 %v205
    %v290 = vunpack.c.h.b16 %v205
    %v291 = vunpack.c.l.b16 %v206
    %v292 = vunpack.c.h.b16 %v206
    %v293 = vunpack.c.l.b16 %v207
    %v294 = vunpack.c.h.b16 %v207
    %v295 = vunpack.c.l.b16 %v208
    %v296 = vunpack.c.h.b16 %v208
    %v297 = vunpack.c.l.b16 %v209
    %v298 = vunpack.c.h.b16 %v209
    %v299 = vunpack.c.l.b16 %v210
    %v300 = vunpack.c.h.b16 %v210
    %v301 = vunpack.c.l.b16 %v211
    %v302 = vunpack.c.h.b16 %v211
    %v303 = vunpack.c.l.b16 %v212
    %v304 = vunpack.c.h.b16 %v212
    %v305 = vunpack.c.l.b16 %v213
    %v306 = vunpack.c.h.b16 %v213
    %v307 = vunpack.c.l.b16 %v214
    %v308 = vunpack.c.h.b16 %v214
    %v309 = vunpack.c.l.b16 %v215
    %v310 = vunpack.c.h.b16 %v215
    %v311 = vunpack.c.l.b16 %v216
    %v312 = vunpack.c.h.b16 %v216
    %v313 = vpack.c.b16 %v251, %v249
    %v314 = vpack.c.b16 %v252, %v250
    %v315 = vpack.c.b16 %v255, %v253
    %v316 = vpack.c.b16 %v256, %v254
    %v317 = vpack.c.b16 %v259, %v257
    %v318 = vpack.c.b16 %v260, %v258
    %v319 = vpack.c.b16 %v263, %v261
    %v320 = vpack.c.b16 %v264, %v262
    %v321 = vpack.c.b16 %v267, %v265
    %v322 = vpack.c.b16 %v268, %v266
    %v323 = vpack.c.b16 %v271, %v269
    %v324 = vpack.c.b16 %v272, %v270
    %v325 = vpack.c.b16 %v275, %v273
    %v326 = vpack.c.b16 %v276, %v274
    %v327 = vpack.c.b16 %v279, %v277
    %v328 = vpack.c.b16 %v280, %v278
    %v329 = vpack.c.b16 %v283, %v281
    %v330 = vpack.c.b16 %v284, %v282
    %v331 = vpack.c.b16 %v287, %v285
    %v332 = vpack.c.b16 %v288, %v286
    %v333 = vpack.c.b16 %v291, %v289
    %v334 = vpack.c.b16 %v292, %v290
    %v335 = vpack.c.b16 %v295, %v293
    %v336 = vpack.c.b16 %v296, %v294
    %v337 = vpack.c.b16 %v299, %v297
    %v338 = vpack.c.b16 %v300, %v298
    %v339 = vpack.c.b16 %v303, %v301
    %v340 = vpack.c.b16 %v304, %v302
    %v341 = vpack.c.b16 %v307, %v305
    %v342 = vpack.c.b16 %v308, %v306
    %v343 = vpack.c.b16 %v311, %v309
    %v344 = vpack.c.b16 %v312, %v310
    %377 = vmatprep.subr.bf16.mxu0 %v328
    %378 = vmatpush1.bf16.msra.mxu0 %v327
    %379 = vmatprep.subr.bf16.mxu0 %v326
    %380 = vmatpush1.bf16.msra.mxu0 %v325
    %381 = vmatprep.subr.bf16.mxu0 %v324
    %382 = vmatpush1.bf16.msra.mxu0 %v323
    %383 = vmatprep.subr.bf16.mxu0 %v322
    %384 = vmatpush1.bf16.msra.mxu0 %v321
    %385 = vmatprep.subr.bf16.mxu0 %v320
    %386 = vmatpush1.bf16.msra.mxu0 %v319
    %387 = vmatprep.subr.bf16.mxu0 %v318
    %388 = vmatpush1.bf16.msra.mxu0 %v317
    %389 = vmatprep.subr.bf16.mxu0 %v316
    %390 = vmatpush1.bf16.msra.mxu0 %v315
    %391 = vmatprep.subr.bf16.mxu0 %v314
    %392 = vmatpush1.bf16.msra.mxu0 %v313
    %393 = vmatprep.subr.bf16.mxu0 %v344
    %394 = vmatpush2.bf16.msra.mxu0 %v343
    %395 = vmatprep.subr.bf16.mxu0 %v342
    %396 = vmatpush2.bf16.msra.mxu0 %v341
    %397 = vmatprep.subr.bf16.mxu0 %v340
    %398 = vmatpush2.bf16.msra.mxu0 %v339
    %399 = vmatprep.subr.bf16.mxu0 %v338
    %400 = vmatpush2.bf16.msra.mxu0 %v337
    %401 = vmatprep.subr.bf16.mxu0 %v336
    %402 = vmatpush2.bf16.msra.mxu0 %v335
    %403 = vmatprep.subr.bf16.mxu0 %v334
    %404 = vmatpush2.bf16.msra.mxu0 %v333
    %405 = vmatprep.subr.bf16.mxu0 %v332
    %406 = vmatpush2.bf16.msra.mxu0 %v331
    %407 = vmatprep.subr.bf16.mxu0 %v330
    %408 = vmatpush2.bf16.msra.mxu0 %v329
    %409 = vmatprep.mubr.bf16.mxu0 %v184
    %410 = vmatmul.mubr.bf16.gmra.mxu0 %v183
    %v411 = vpop.f32.mrf.mxu0
    %v412 = vadd.f32 0.0, %v411
    %v413 = vpop.f32.mrf.mxu0
    %v414 = vadd.f32 0.0, %v413
    %v415 = vpop.f32.mrf.mxu0
    %v416 = vpop.f32.mrf.mxu0
    %417 = vdwg.mxu0
    %v418 = vpack.c.bf16 %v412, %v412
    %v419 = vpack.c.bf16 %v414, %v414
    %v420 = vld [vmem:[%s4] sm:$0x3]
    %v423 = vunpack.c.l.s4 1966171168
    %v424 = vunpack.c.0.s8 %v423
    %v425 = vlaneseq
    %v426 = vshrl.u32 %v425, 7
    %v427 = vsub.s32 %v424, %v426
    %v428 = vrot.slane %v420, %v427
    %v429 = vcombine.high %v428, %v428
    %v431 = vunpack.c.l.s4 1966171168
    %v432 = vunpack.c.0.s8 %v431
    %v433 = vlaneseq
    %v434 = vshrl.u32 %v433, 7
    %v435 = vsub.s32 %v432, %v434
    %v436 = vrot.slane %v428, %v435
    %v438 = vunpack.c.l.s4 1966171168
    %v439 = vunpack.c.0.s8 %v438
    %v440 = vlaneseq
    %v441 = vshrl.u32 %v440, 7
    %v442 = vsub.s32 %v439, %v441
    %v443 = vrot.slane %v429, %v442
    %v445 = vpack.i.b16 %v436, %v436
    %v447 = vlaneseq
    %v448 = vshrl.u32 %v447, 7
    %v449 = vsub.s32 0, %v448
    %v450 = vrot.slane %v445, %v449
    %v452 = vpack.i.b16 %v443, %v443
    %v454 = vlaneseq
    %v455 = vshrl.u32 %v454, 7
    %v456 = vsub.s32 0, %v455
    %v457 = vrot.slane %v452, %v456
    %v458 = vadd.bf16 %v418, %v450
    %v459 = vadd.bf16 %v419, %v457
    %vm460 = vcmp.gt.bf16.partialorder %v458, 0
    %vm461 = vcmp.gt.bf16.partialorder %v459, 0
    %v462 = vmul.bf16 %v458, 1045249613
    %v463 = vmul.bf16 %v459, 1045249613
    %v464 = vsel %vm460, %v458, %v462
    %v465 = vsel %vm461, %v459, %v463
    %v466 = vld [vmem:[%s5] sm:$0xf]
    %v467 = vld [vmem:[%s5 + $0x4] sm:$0xf]
    %v468 = vld [vmem:[%s5 + $0x8] sm:$0xf]
    %v469 = vld [vmem:[%s5 + $0xc] sm:$0xf]
    %v470 = vld [vmem:[%s5 + $0x10] sm:$0xf]
    %v471 = vld [vmem:[%s5 + $0x14] sm:$0xf]
    %v472 = vld [vmem:[%s5 + $0x18] sm:$0xf]
    %v473 = vld [vmem:[%s5 + $0x1c] sm:$0xf]
    %v474 = vld [vmem:[%s5 + $0x20] sm:$0xf]
    %v475 = vld [vmem:[%s5 + $0x24] sm:$0xf]
    %v476 = vld [vmem:[%s5 + $0x28] sm:$0xf]
    %v477 = vld [vmem:[%s5 + $0x2c] sm:$0xf]
    %v478 = vld [vmem:[%s5 + $0x30] sm:$0xf]
    %v479 = vld [vmem:[%s5 + $0x34] sm:$0xf]
    %v480 = vld [vmem:[%s5 + $0x38] sm:$0xf]
    %v481 = vld [vmem:[%s5 + $0x3c] sm:$0xf]
    %v482 = vld [vmem:[%s5 + $0x40] sm:$0xf]
    %v483 = vld [vmem:[%s5 + $0x44] sm:$0xf]
    %v484 = vld [vmem:[%s5 + $0x48] sm:$0xf]
    %v485 = vld [vmem:[%s5 + $0x4c] sm:$0xf]
    %v486 = vld [vmem:[%s5 + $0x50] sm:$0xf]
    %v487 = vld [vmem:[%s5 + $0x54] sm:$0xf]
    %v488 = vld [vmem:[%s5 + $0x58] sm:$0xf]
    %v489 = vld [vmem:[%s5 + $0x5c] sm:$0xf]
    %v490 = vld [vmem:[%s5 + $0x60] sm:$0xf]
    %v491 = vld [vmem:[%s5 + $0x64] sm:$0xf]
    %v492 = vld [vmem:[%s5 + $0x68] sm:$0xf]
    %v493 = vld [vmem:[%s5 + $0x6c] sm:$0xf]
    %v494 = vld [vmem:[%s5 + $0x70] sm:$0xf]
    %v495 = vld [vmem:[%s5 + $0x74] sm:$0xf]
    %v496 = vld [vmem:[%s5 + $0x78] sm:$0xf]
    %v497 = vld [vmem:[%s5 + $0x7c] sm:$0xf]
    %v498 = vld [vmem:[%s6] sm:$0x1]
    %v500 = vlaneseq
    %v501 = vshrl.u32 %v500, 7
    %v502 = vsub.s32 0, %v501
    %v503 = vrot.slane %v498, %v502
    %v537 = vunpack.c.l.b16 %v466
    %v538 = vunpack.c.l.b16 %v467
    %v539 = vunpack.c.l.b16 %v468
    %v540 = vunpack.c.l.b16 %v469
    %v541 = vunpack.c.l.b16 %v470
    %v542 = vunpack.c.l.b16 %v471
    %v543 = vunpack.c.l.b16 %v472
    %v544 = vunpack.c.l.b16 %v473
    %v545 = vunpack.c.l.b16 %v474
    %v546 = vunpack.c.l.b16 %v475
    %v547 = vunpack.c.l.b16 %v476
    %v548 = vunpack.c.l.b16 %v477
    %v549 = vunpack.c.l.b16 %v478
    %v550 = vunpack.c.l.b16 %v479
    %v551 = vunpack.c.l.b16 %v480
    %v552 = vunpack.c.l.b16 %v481
    %v553 = vunpack.c.l.b16 %v482
    %v554 = vunpack.c.l.b16 %v483
    %v555 = vunpack.c.l.b16 %v484
    %v556 = vunpack.c.l.b16 %v485
    %v557 = vunpack.c.l.b16 %v486
    %v558 = vunpack.c.l.b16 %v487
    %v559 = vunpack.c.l.b16 %v488
    %v560 = vunpack.c.l.b16 %v489
    %v561 = vunpack.c.l.b16 %v490
    %v562 = vunpack.c.l.b16 %v491
    %v563 = vunpack.c.l.b16 %v492
    %v564 = vunpack.c.l.b16 %v493
    %v565 = vunpack.c.l.b16 %v494
    %v566 = vunpack.c.l.b16 %v495
    %v567 = vunpack.c.l.b16 %v496
    %v568 = vunpack.c.l.b16 %v497
    %v569 = vpack.c.b16 %v538, %v537
    %v570 = vpack.c.b16 %v540, %v539
    %v571 = vpack.c.b16 %v542, %v541
    %v572 = vpack.c.b16 %v544, %v543
    %v573 = vpack.c.b16 %v546, %v545
    %v574 = vpack.c.b16 %v548, %v547
    %v575 = vpack.c.b16 %v550, %v549
    %v576 = vpack.c.b16 %v552, %v551
    %v577 = vpack.c.b16 %v554, %v553
    %v578 = vpack.c.b16 %v556, %v555
    %v579 = vpack.c.b16 %v558, %v557
    %v580 = vpack.c.b16 %v560, %v559
    %v581 = vpack.c.b16 %v562, %v561
    %v582 = vpack.c.b16 %v564, %v563
    %v583 = vpack.c.b16 %v566, %v565
    %v584 = vpack.c.b16 %v568, %v567
    %601 = vmatprep.subr.bf16.mxu0 0
    %602 = vmatpush1.bf16.msra.mxu0 %v576
    %603 = vmatprep.subr.bf16.mxu0 0
    %604 = vmatpush1.bf16.msra.mxu0 %v575
    %605 = vmatprep.subr.bf16.mxu0 0
    %606 = vmatpush1.bf16.msra.mxu0 %v574
    %607 = vmatprep.subr.bf16.mxu0 0
    %608 = vmatpush1.bf16.msra.mxu0 %v573
    %609 = vmatprep.subr.bf16.mxu0 0
    %610 = vmatpush1.bf16.msra.mxu0 %v572
    %611 = vmatprep.subr.bf16.mxu0 0
    %612 = vmatpush1.bf16.msra.mxu0 %v571
    %613 = vmatprep.subr.bf16.mxu0 0
    %614 = vmatpush1.bf16.msra.mxu0 %v570
    %615 = vmatprep.subr.bf16.mxu0 0
    %616 = vmatpush1.bf16.msra.mxu0 %v569
    %617 = vmatprep.subr.bf16.mxu0 0
    %618 = vmatpush2.bf16.msra.mxu0 %v584
    %619 = vmatprep.subr.bf16.mxu0 0
    %620 = vmatpush2.bf16.msra.mxu0 %v583
    %621 = vmatprep.subr.bf16.mxu0 0
    %622 = vmatpush2.bf16.msra.mxu0 %v582
    %623 = vmatprep.subr.bf16.mxu0 0
    %624 = vmatpush2.bf16.msra.mxu0 %v581
    %625 = vmatprep.subr.bf16.mxu0 0
    %626 = vmatpush2.bf16.msra.mxu0 %v580
    %627 = vmatprep.subr.bf16.mxu0 0
    %628 = vmatpush2.bf16.msra.mxu0 %v579
    %629 = vmatprep.subr.bf16.mxu0 0
    %630 = vmatpush2.bf16.msra.mxu0 %v578
    %631 = vmatprep.subr.bf16.mxu0 0
    %632 = vmatpush2.bf16.msra.mxu0 %v577
    %633 = vmatprep.mubr.bf16.mxu0 %v465
    %634 = vmatmul.mubr.bf16.gmra.mxu0 %v464
    %v635 = vpop.f32.mrf.mxu0
    %v636 = vadd.f32 %v503, %v635
    %v637 = vpop.f32.mrf.mxu0
    %v638 = vpop.f32.mrf.mxu0
    %v639 = vpop.f32.mrf.mxu0
    %640 = vdwg.mxu0
    %v641 = vtanh.pop %v636
    %vm642 = vcmask 15360
    %643 = vst.msk [vmem:[%s7] sm:$0xff] %vm642, %v641
    // Predicated region
    $region34: #{latent_gaussian_policy_forward.1} parent=1 // pred_check
      _
    $region35: #{latent_gaussian_policy_forward.1} parent=1 // pred_check_branch
      %645 = sbr.rel (0) target = $region37
    $region36: #{latent_gaussian_policy_forward.1} parent=1 // pred_region
      _
    $region37: #{latent_gaussian_policy_forward.1} parent=1 // pred_fallthru
      _
    // Predicated region
    $region38: #{latent_gaussian_policy_forward.1} parent=1 // pred_check
      _
    $region39: #{latent_gaussian_policy_forward.1} parent=1 // pred_check_branch
      %647 = sbr.rel (0) target = $region41
    $region40: #{latent_gaussian_policy_forward.1} parent=1 // pred_region
      _
    $region41: #{latent_gaussian_policy_forward.1} parent=1 // pred_fallthru
      _
    %648 = vsyncpa [#allocation3], 1

</llo_original>
